<compile_context>
chip_gen: v7x
topology: tpu7x:2x2x1
jax: 0.10.0
libtpu: 0.0.40
codegen_flags: <defaults>
</compile_context>

<pallas_src>
import jax
import jax.numpy as jnp
from jax.experimental import pallas as pl
from jax.experimental.pallas import tpu as pltpu


def mlp_kernel(x_ref,
               w_in_ref, b_in_ref,
               w1_ref, b1_ref,
               w2_ref, b2_ref,
               w_out_t_ref, b_out_ref,
               o_ref):
    # --- fc_in (K padded 9->16) as a bf16 MXU dot, f32 accumulation + ReLU ---
    h = jnp.dot(x_ref[...], w_in_ref[...], preferred_element_type=jnp.float32)
    h = jnp.maximum(h + b_in_ref[...], 0.0)                     # (TB, 256) f32

    # --- fc_list[0] 256->32 (lane-padded to 128), dropout=id (eval), ReLU ---
    h = jnp.dot(h.astype(jnp.bfloat16), w1_ref[...],
                preferred_element_type=jnp.float32)
    h = jnp.maximum(h + b1_ref[...], 0.0)                       # (TB, 128); cols 32.. stay 0

    # --- fc_list[1] 32->8 (padded to 128x128), dropout=id (eval), ReLU ---
    h = jnp.dot(h.astype(jnp.bfloat16), w2_ref[...],
                preferred_element_type=jnp.float32)
    h = jnp.maximum(h + b2_ref[...], 0.0)                       # (TB, 128); cols 8.. stay 0

    # --- fc_out 8->2 OFF the MXU: VPU broadcast-mul + XLU lane reduction ---
    # w_out_t is (n_output, 128) with lanes 8.. zero, so padded lanes add 0.
    n_output = o_ref.shape[-1]
    for j in range(n_output):                                   # static, tiny unroll
        yj = jnp.sum(h * w_out_t_ref[j:j + 1, :], axis=-1, keepdims=True)
        o_ref[:, j:j + 1] = (yj + b_out_ref[:, j:j + 1]).astype(o_ref.dtype)


def _round_up(n, m):
    return ((n + m - 1) // m) * m


def pad_params(params, n_input_pad):
    """Zero-pad the narrow layers out to 128 lanes and convert the MXU operands
       to bf16 once, host-side. ReLU(0)=0 + zero weight rows/cols + zero bias
       pads keep the padded lanes exactly zero, so the math is unchanged.
       fc_out stays f32 (it runs on the VPU/XLU, not the MXU) and is stored
       pre-transposed as (n_output, 128)."""
    w_in, b_in, w1, b1, w2, b2, w_out, b_out = params
    n_output = w_out.shape[1]

    w_in_p = jnp.zeros((n_input_pad, 256), jnp.bfloat16)
    w_in_p = w_in_p.at[:w_in.shape[0], :].set(w_in.astype(jnp.bfloat16))

    w1p = jnp.zeros((256, 128), jnp.bfloat16).at[:, :w1.shape[1]].set(
        w1.astype(jnp.bfloat16))
    b1p = jnp.zeros((1, 128), jnp.float32).at[:, :b1.shape[1]].set(b1)

    w2p = jnp.zeros((128, 128), jnp.bfloat16).at[:w2.shape[0], :w2.shape[1]].set(
        w2.astype(jnp.bfloat16))
    b2p = jnp.zeros((1, 128), jnp.float32).at[:, :b2.shape[1]].set(b2)

    w_out_t = jnp.zeros((n_output, 128), jnp.float32).at[:, :w_out.shape[0]].set(
        w_out.T.astype(jnp.float32))

    return (w_in_p, b_in, w1p, b1p, w2p, b2p, w_out_t, b_out)


def mlp_forward(x, params, *, tile_b=2048, x_dtype=jnp.bfloat16):
    batch, n_input = x.shape
    n_output = params[6].shape[1]                 # w_out is (8, n_output)
    n_input_pad = _round_up(n_input, 16)          # bf16 sublane packing for K

    w_in, b_in, w1, b1, w2, b2, w_out_t, b_out = pad_params(params, n_input_pad)

    # Adaptive batch tiling: pick the number of grid steps first, then size the
    # tile to cover the batch with minimal padding (multiple of 16 rows for
    # bf16 sublane packing). Keep >= 4 steps when the batch allows so v7x's
    # two TensorCores both get work on the "parallel" axis.
    steps = pl.cdiv(batch, tile_b)
    steps = max(steps, min(4, pl.cdiv(batch, 16)))
    tb = _round_up(pl.cdiv(batch, steps), 16)
    padded_b = steps * tb

    x = jnp.pad(x, ((0, padded_b - batch), (0, n_input_pad - n_input)))
    x = x.astype(x_dtype)   # bf16 input stream; all accumulation stays f32

    # Weights/biases: constant block index -> fetched once, resident across grid.
    def resident(arr):
        return pl.BlockSpec(arr.shape, lambda i: (0, 0))

    weights = (w_in, b_in, w1, b1, w2, b2, w_out_t, b_out)
    in_specs = [pl.BlockSpec((tb, n_input_pad), lambda i: (i, 0))]   # x streamed
    in_specs += [resident(w) for w in weights]
    out_specs = pl.BlockSpec((tb, n_output), lambda i: (i, 0))

    weight_bytes = sum(int(w.size) * w.dtype.itemsize for w in weights)
    cost = pl.CostEstimate(
        flops=2 * padded_b * (n_input_pad * 256 + 256 * 128 + 128 * 128
                              + 128 * n_output),
        transcendentals=0,
        bytes_accessed=padded_b * (n_input_pad * x.dtype.itemsize + n_output * 4)
                       + weight_bytes,
    )

    out = pl.pallas_call(
        mlp_kernel,
        out_shape=jax.ShapeDtypeStruct((padded_b, n_output), jnp.float32),
        grid=(steps,),
        in_specs=in_specs,
        out_specs=out_specs,
        compiler_params=pltpu.CompilerParams(
            dimension_semantics=("parallel",),     # shard batch over TCs (v7x)
            vmem_limit_bytes=48 * 1024 * 1024,     # safe on v7x's 64 MiB VMEM
        ),
        cost_estimate=cost,
    )(x, *weights)
    return out[:batch]


def init_params(key, n_input=9, n_output=2):
    """Deterministic init mirroring the PyTorch module:
       weights ~ U(-0.1, 0.1); biases use PyTorch Linear default
       U(-1/sqrt(fan_in), 1/sqrt(fan_in))."""
    dims = [(n_input, 256), (256, 32), (32, 8), (8, n_output)]
    keys = jax.random.split(key, 2 * len(dims))
    params = []
    for i, (fan_in, fan_out) in enumerate(dims):
        kw, kb = keys[2 * i], keys[2 * i + 1]
        w = jax.random.uniform(kw, (fan_in, fan_out), jnp.float32,
                               minval=-0.1, maxval=0.1)
        bound = 1.0 / (fan_in ** 0.5)
        # biases passed as (1, fan_out) so broadcasting inside the kernel is 2D
        b = jax.random.uniform(kb, (1, fan_out), jnp.float32,
                               minval=-bound, maxval=bound)
        params.extend([w, b])
    return tuple(params)


def mlp_reference(x, params):
    """Pure-JAX reference reproducing the kernel's numerics: bf16 operands for
       fc_in/fc1/fc2 with f32 accumulation, f32 fc_out epilogue.
       (A full-f32 PyTorch forward differs only by bf16 operand rounding.)"""
    w_in, b_in, w1, b1, w2, b2, w_out, b_out = params

    def q(a):
        return a.astype(jnp.bfloat16).astype(jnp.float32)

    h = jnp.maximum(jnp.dot(q(x), q(w_in)) + b_in, 0.0)
    h = jnp.maximum(jnp.dot(q(h), q(w1)) + b1, 0.0)
    h = jnp.maximum(jnp.dot(q(h), q(w2)) + b2, 0.0)
    return jnp.dot(h, w_out) + b_out


if __name__ == "__main__":
    key = jax.random.PRNGKey(0)
    k_x, k_p = jax.random.split(key)

    batch, n_input, n_output = 8, 9, 2
    x = jax.random.normal(k_x, (batch, n_input), jnp.float32)
    params = init_params(k_p, n_input=n_input, n_output=n_output)

    out = jax.block_until_ready(mlp_forward(x, params))

    ref = mlp_reference(x, params)
    assert out.shape == (batch, n_output)
    assert jnp.allclose(out, ref, atol=2e-3, rtol=2e-3), \
        f"max abs err {jnp.max(jnp.abs(out - ref))}"

    print("KERNEL_OK")
</pallas_src>

<mosaic_0001>
module attributes {stable_mosaic.version = 11 : i64} {
  func.func @mlp_kernel(%arg0: i32, %arg1: memref<16x16xbf16, #tpu.memory_space<vmem>>, %arg2: memref<16x256xbf16, #tpu.memory_space<vmem>>, %arg3: memref<1x256xf32, #tpu.memory_space<vmem>>, %arg4: memref<256x128xbf16, #tpu.memory_space<vmem>>, %arg5: memref<1x128xf32, #tpu.memory_space<vmem>>, %arg6: memref<128x128xbf16, #tpu.memory_space<vmem>>, %arg7: memref<1x128xf32, #tpu.memory_space<vmem>>, %arg8: memref<2x128xf32, #tpu.memory_space<vmem>>, %arg9: memref<1x2xf32, #tpu.memory_space<vmem>>, %arg10: memref<16x2xf32, #tpu.memory_space<vmem>>) attributes {dimension_semantics = [#tpu.dimension_semantics<parallel>], iteration_bounds = array<i64: 1>, scalar_prefetch = 0 : i64, scratch_operands = 0 : i64, tpu.core_type = #tpu.core_type<tc>, window_params = [{transform_indices = @transform_0, window_bounds = array<i64: 16, 16>}, {pipeline_mode = #tpu.pipeline_mode<synchronous>, transform_indices = @transform_1, window_bounds = array<i64: 16, 256>}, {pipeline_mode = #tpu.pipeline_mode<synchronous>, transform_indices = @transform_2, window_bounds = array<i64: 1, 256>}, {pipeline_mode = #tpu.pipeline_mode<synchronous>, transform_indices = @transform_3, window_bounds = array<i64: 256, 128>}, {pipeline_mode = #tpu.pipeline_mode<synchronous>, transform_indices = @transform_4, window_bounds = array<i64: 1, 128>}, {pipeline_mode = #tpu.pipeline_mode<synchronous>, transform_indices = @transform_5, window_bounds = array<i64: 128, 128>}, {pipeline_mode = #tpu.pipeline_mode<synchronous>, transform_indices = @transform_6, window_bounds = array<i64: 1, 128>}, {pipeline_mode = #tpu.pipeline_mode<synchronous>, transform_indices = @transform_7, window_bounds = array<i64: 2, 128>}, {pipeline_mode = #tpu.pipeline_mode<synchronous>, transform_indices = @transform_8, window_bounds = array<i64: 1, 2>}, {transform_indices = @transform_9, window_bounds = array<i64: 16, 2>}]} {
    %c0 = arith.constant 0 : index
    %c0_0 = arith.constant 0 : index
    %0 = vector.load %arg1[%c0, %c0_0] : memref<16x16xbf16, #tpu.memory_space<vmem>>, vector<16x16xbf16>
    %c0_1 = arith.constant 0 : index
    %c0_2 = arith.constant 0 : index
    %1 = vector.load %arg2[%c0_1, %c0_2] : memref<16x256xbf16, #tpu.memory_space<vmem>>, vector<16x256xbf16>
    %cst = arith.constant dense<0.000000e+00> : vector<16x256xf32>
    %2 = tpu.matmul %0, %1, %cst {dimension_numbers = #tpu.dot_dimension_numbers<[1], [0], [0], [1], [0, 0, 1, 1], [], []>} : vector<16x16xbf16>, vector<16x256xbf16>, vector<16x256xf32> -> vector<16x256xf32>
    %c0_3 = arith.constant 0 : index
    %c0_4 = arith.constant 0 : index
    %3 = vector.load %arg3[%c0_3, %c0_4] : memref<1x256xf32, #tpu.memory_space<vmem>>, vector<1x256xf32>
    %4 = vector.broadcast %3 : vector<1x256xf32> to vector<16x256xf32>
    %5 = arith.addf %2, %4 : vector<16x256xf32>
    %cst_5 = arith.constant 0.000000e+00 : f32
    %6 = vector.broadcast %cst_5 : f32 to vector<16x256xf32>
    %7 = arith.maximumf %5, %6 : vector<16x256xf32>
    %8 = arith.truncf %7 : vector<16x256xf32> to vector<16x256xbf16>
    %c0_6 = arith.constant 0 : index
    %c0_7 = arith.constant 0 : index
    %9 = vector.load %arg4[%c0_6, %c0_7] : memref<256x128xbf16, #tpu.memory_space<vmem>>, vector<256x128xbf16>
    %cst_8 = arith.constant dense<0.000000e+00> : vector<16x128xf32>
    %10 = tpu.matmul %8, %9, %cst_8 {dimension_numbers = #tpu.dot_dimension_numbers<[1], [0], [0], [1], [0, 0, 1, 1], [], []>} : vector<16x256xbf16>, vector<256x128xbf16>, vector<16x128xf32> -> vector<16x128xf32>
    %c0_9 = arith.constant 0 : index
    %c0_10 = arith.constant 0 : index
    %11 = vector.load %arg5[%c0_9, %c0_10] : memref<1x128xf32, #tpu.memory_space<vmem>>, vector<1x128xf32>
    %12 = vector.broadcast %11 : vector<1x128xf32> to vector<16x128xf32>
    %13 = arith.addf %10, %12 : vector<16x128xf32>
    %cst_11 = arith.constant 0.000000e+00 : f32
    %14 = vector.broadcast %cst_11 : f32 to vector<16x128xf32>
    %15 = arith.maximumf %13, %14 : vector<16x128xf32>
    %16 = arith.truncf %15 : vector<16x128xf32> to vector<16x128xbf16>
    %c0_12 = arith.constant 0 : index
    %c0_13 = arith.constant 0 : index
    %17 = vector.load %arg6[%c0_12, %c0_13] : memref<128x128xbf16, #tpu.memory_space<vmem>>, vector<128x128xbf16>
    %cst_14 = arith.constant dense<0.000000e+00> : vector<16x128xf32>
    %18 = tpu.matmul %16, %17, %cst_14 {dimension_numbers = #tpu.dot_dimension_numbers<[1], [0], [0], [1], [0, 0, 1, 1], [], []>} : vector<16x128xbf16>, vector<128x128xbf16>, vector<16x128xf32> -> vector<16x128xf32>
    %c0_15 = arith.constant 0 : index
    %c0_16 = arith.constant 0 : index
    %19 = vector.load %arg7[%c0_15, %c0_16] : memref<1x128xf32, #tpu.memory_space<vmem>>, vector<1x128xf32>
    %20 = vector.broadcast %19 : vector<1x128xf32> to vector<16x128xf32>
    %21 = arith.addf %18, %20 : vector<16x128xf32>
    %cst_17 = arith.constant 0.000000e+00 : f32
    %22 = vector.broadcast %cst_17 : f32 to vector<16x128xf32>
    %23 = arith.maximumf %21, %22 : vector<16x128xf32>
    %c0_18 = arith.constant 0 : index
    %c0_19 = arith.constant 0 : index
    %24 = vector.load %arg8[%c0_18, %c0_19] : memref<2x128xf32, #tpu.memory_space<vmem>>, vector<1x128xf32>
    %25 = vector.broadcast %24 : vector<1x128xf32> to vector<16x128xf32>
    %26 = arith.mulf %23, %25 : vector<16x128xf32>
    %cst_20 = arith.constant dense<0.000000e+00> : vector<16xf32>
    %27 = vector.multi_reduction <add>, %26, %cst_20 [1] : vector<16x128xf32> to vector<16xf32>
    %28 = vector.shape_cast %27 : vector<16xf32> to vector<16x1xf32>
    %c0_21 = arith.constant 0 : index
    %c0_22 = arith.constant 0 : index
    %29 = vector.load %arg9[%c0_21, %c0_22] : memref<1x2xf32, #tpu.memory_space<vmem>>, vector<1x1xf32>
    %30 = vector.broadcast %29 : vector<1x1xf32> to vector<16x1xf32>
    %31 = arith.addf %28, %30 : vector<16x1xf32>
    %c0_23 = arith.constant 0 : index
    %c0_24 = arith.constant 0 : index
    %32 = vector.load %arg10[%c0_23, %c0_24] : memref<16x2xf32, #tpu.memory_space<vmem>>, vector<16x1xf32>
    tpu.vector_store %arg10[%c0_23, %c0_24], %31 {strides = array<i32>} : memref<16x2xf32, #tpu.memory_space<vmem>>, vector<16x1xf32>,
    %c1 = arith.constant 1 : index
    %c0_25 = arith.constant 0 : index
    %33 = vector.load %arg8[%c1, %c0_25] : memref<2x128xf32, #tpu.memory_space<vmem>>, vector<1x128xf32>
    %34 = vector.broadcast %33 : vector<1x128xf32> to vector<16x128xf32>
    %35 = arith.mulf %23, %34 : vector<16x128xf32>
    %cst_26 = arith.constant dense<0.000000e+00> : vector<16xf32>
    %36 = vector.multi_reduction <add>, %35, %cst_26 [1] : vector<16x128xf32> to vector<16xf32>
    %37 = vector.shape_cast %36 : vector<16xf32> to vector<16x1xf32>
    %c0_27 = arith.constant 0 : index
    %c1_28 = arith.constant 1 : index
    %38 = vector.load %arg9[%c0_27, %c1_28] : memref<1x2xf32, #tpu.memory_space<vmem>>, vector<1x1xf32>
    %39 = vector.broadcast %38 : vector<1x1xf32> to vector<16x1xf32>
    %40 = arith.addf %37, %39 : vector<16x1xf32>
    %c0_29 = arith.constant 0 : index
    %c1_30 = arith.constant 1 : index
    %41 = vector.load %arg10[%c0_29, %c1_30] : memref<16x2xf32, #tpu.memory_space<vmem>>, vector<16x1xf32>
    tpu.vector_store %arg10[%c0_29, %c1_30], %40 {strides = array<i32>} : memref<16x2xf32, #tpu.memory_space<vmem>>, vector<16x1xf32>,
    return
  }
  func.func @transform_0(%arg0: i32) -> (i32, i32) {
    %c0_i32 = arith.constant 0 : i32
    %c0_i32_0 = arith.constant 0 : i32
    return %arg0, %c0_i32 : i32, i32
  }
  func.func @transform_1(%arg0: i32) -> (i32, i32) {
    %c0_i32 = arith.constant 0 : i32
    %c0_i32_0 = arith.constant 0 : i32
    %c0_i32_1 = arith.constant 0 : i32
    return %c0_i32, %c0_i32_0 : i32, i32
  }
  func.func @transform_2(%arg0: i32) -> (i32, i32) {
    %c0_i32 = arith.constant 0 : i32
    %c0_i32_0 = arith.constant 0 : i32
    %c0_i32_1 = arith.constant 0 : i32
    return %c0_i32, %c0_i32_0 : i32, i32
  }
  func.func @transform_3(%arg0: i32) -> (i32, i32) {
    %c0_i32 = arith.constant 0 : i32
    %c0_i32_0 = arith.constant 0 : i32
    %c0_i32_1 = arith.constant 0 : i32
    return %c0_i32, %c0_i32_0 : i32, i32
  }
  func.func @transform_4(%arg0: i32) -> (i32, i32) {
    %c0_i32 = arith.constant 0 : i32
    %c0_i32_0 = arith.constant 0 : i32
    %c0_i32_1 = arith.constant 0 : i32
    return %c0_i32, %c0_i32_0 : i32, i32
  }
  func.func @transform_5(%arg0: i32) -> (i32, i32) {
    %c0_i32 = arith.constant 0 : i32
    %c0_i32_0 = arith.constant 0 : i32
    %c0_i32_1 = arith.constant 0 : i32
    return %c0_i32, %c0_i32_0 : i32, i32
  }
  func.func @transform_6(%arg0: i32) -> (i32, i32) {
    %c0_i32 = arith.constant 0 : i32
    %c0_i32_0 = arith.constant 0 : i32
    %c0_i32_1 = arith.constant 0 : i32
    return %c0_i32, %c0_i32_0 : i32, i32
  }
  func.func @transform_7(%arg0: i32) -> (i32, i32) {
    %c0_i32 = arith.constant 0 : i32
    %c0_i32_0 = arith.constant 0 : i32
    %c0_i32_1 = arith.constant 0 : i32
    return %c0_i32, %c0_i32_0 : i32, i32
  }
  func.func @transform_8(%arg0: i32) -> (i32, i32) {
    %c0_i32 = arith.constant 0 : i32
    %c0_i32_0 = arith.constant 0 : i32
    %c0_i32_1 = arith.constant 0 : i32
    return %c0_i32, %c0_i32_0 : i32, i32
  }
  func.func @transform_9(%arg0: i32) -> (i32, i32) {
    %c0_i32 = arith.constant 0 : i32
    %c0_i32_0 = arith.constant 0 : i32
    return %arg0, %c0_i32 : i32, i32
  }
}

</mosaic_0001>

<llo_original>
// kernel: tpu_custom_call.1
$region0: #{tpu_custom_call.1}
  #allocation0 [shape = 'u32[]', space=smem, size = 0x4, offset = 0x4, fixed_abs, tag = 'smem constant byte address 0x4 - core index']
  #allocation1 [shape = 'u32[144,128]{1,0:T(1,128)}', space=vmem, size = 0x12000, scoped, tag = 'internal scratch']
  %s0 = inlined_call_operand.hbm [shape: bf16[16,16], index: 0, kind: input, shape index: {}]
  %s1 = inlined_call_operand.hbm [shape: bf16[16,256], index: 1, kind: input, shape index: {}]
  %s2 = inlined_call_operand.vmem [shape: f32[1,256], index: 2, kind: input, shape index: {}]
  %s3 = inlined_call_operand.hbm [shape: bf16[256,128], index: 3, kind: input, shape index: {}]
  %s4 = inlined_call_operand.vmem [shape: f32[1,128], index: 4, kind: input, shape index: {}]
  %s5 = inlined_call_operand.hbm [shape: bf16[128,128], index: 5, kind: input, shape index: {}]
  %s6 = inlined_call_operand.vmem [shape: f32[1,128], index: 6, kind: input, shape index: {}]
  %s7 = inlined_call_operand.vmem [shape: f32[2,128], index: 7, kind: input, shape index: {}]
  %s8 = inlined_call_operand.vmem [shape: f32[1,2], index: 8, kind: input, shape index: {}]
  %s9 = inlined_call_operand.vmem [shape: f32[16,2], index: 9, kind: output, shape index: {}]
  %s10 = sld [smem:[#allocation0]]
  $region62: #{tpu_custom_call.1} parent=0
    _
  %s12 = ssub.s32 1, %s10
  %s13 = scalar_select 0, %s12, %s10
  $region1: #{tpu_custom_call.1} parent=0
    #allocation2 [shape = 'u8[4096]{0}', space=vmem, size = 0x1000, scoped, tag = 'input window, operand 0, single buffered']
    #allocation3 [shape = 's32[1]{0}', space=sflag, size = 0x4, scoped, tag = 'scoped memory for tpu_custom_call.1']
    #allocation4 [shape = 'u8[8192]{0}', space=vmem, size = 0x2000, scoped, tag = 'input window, operand 1, single buffered']
    #allocation5 [shape = 's32[1]{0}', space=sflag, size = 0x4, scoped, tag = 'scoped memory for tpu_custom_call.1']
    #allocation6 [shape = 'u8[65536]{0}', space=vmem, size = 0x10000, scoped, tag = 'input window, operand 3, single buffered']
    #allocation7 [shape = 'u8[32768]{0}', space=vmem, size = 0x8000, scoped, tag = 'input window, operand 5, single buffered']
    #allocation8 [shape = 's32[1]{0}', space=sflag, size = 0x4, scoped, tag = 'scoped memory for tpu_custom_call.1']
    %14 = vsyncpa [#allocation3], 0
    %15 = vsyncpa [#allocation5], 0
    %16 = vsyncpa [#allocation8], 0
    // Predicated region
    $region2: #{tpu_custom_call.1} parent=1 // pred_check
      _
    $region3: #{tpu_custom_call.1} parent=1 // pred_check_branch
      %18 = sbr.rel (0) target = $region5
    $region4: #{tpu_custom_call.1} parent=1 // pred_region
      %s20 = ssub.s32 128, 128
      %21 = vsyncadd [#allocation3], %s20
      %s22 = sshll.u32 [#allocation2], 4
      %s23 = int_to_ptr.vmem [resolvable:$true] %s22
      %28 = dma.hbm_to_vmem [thread:$0]  %s0, 128, %s23, [#allocation3], 64, 64, 4
    $region5: #{tpu_custom_call.1} parent=1 // pred_fallthru
      _
    // Predicated region
    $region6: #{tpu_custom_call.1} parent=1 // pred_check
      _
    $region7: #{tpu_custom_call.1} parent=1 // pred_check_branch
      %30 = sbr.rel (0) target = $region9
    $region8: #{tpu_custom_call.1} parent=1 // pred_region
      %s32 = ssub.s32 256, 256
      %33 = vsyncadd [#allocation5], %s32
      %s34 = sshll.u32 [#allocation4], 4
      %s35 = int_to_ptr.vmem [resolvable:$true] %s34
      %40 = dma.hbm_to_vmem [thread:$0]  %s1, 256, %s35, [#allocation5], 128, 128, 8
    $region9: #{tpu_custom_call.1} parent=1 // pred_fallthru
      _
    // Predicated region
    $region10: #{tpu_custom_call.1} parent=1 // pred_check
      _
    $region11: #{tpu_custom_call.1} parent=1 // pred_check_branch
      %42 = sbr.rel (0) target = $region13
    $region12: #{tpu_custom_call.1} parent=1 // pred_region
      _
    $region13: #{tpu_custom_call.1} parent=1 // pred_fallthru
      _
    // Predicated region
    $region14: #{tpu_custom_call.1} parent=1 // pred_check
      _
    $region15: #{tpu_custom_call.1} parent=1 // pred_check_branch
      %44 = sbr.rel (0) target = $region17
    $region16: #{tpu_custom_call.1} parent=1 // pred_region
      %s46 = ssub.s32 2048, 2048
      %47 = vsyncadd [#allocation5], %s46
      %s48 = sshll.u32 [#allocation6], 4
      %s49 = int_to_ptr.vmem [resolvable:$true] %s48
      %54 = dma.hbm_to_vmem [thread:$0]  %s3, 2048, %s49, [#allocation5], 64, 64, 4
    $region17: #{tpu_custom_call.1} parent=1 // pred_fallthru
      _
    // Predicated region
    $region18: #{tpu_custom_call.1} parent=1 // pred_check
      _
    $region19: #{tpu_custom_call.1} parent=1 // pred_check_branch
      %56 = sbr.rel (0) target = $region21
    $region20: #{tpu_custom_call.1} parent=1 // pred_region
      _
    $region21: #{tpu_custom_call.1} parent=1 // pred_fallthru
      _
    // Predicated region
    $region22: #{tpu_custom_call.1} parent=1 // pred_check
      _
    $region23: #{tpu_custom_call.1} parent=1 // pred_check_branch
      %58 = sbr.rel (0) target = $region25
    $region24: #{tpu_custom_call.1} parent=1 // pred_region
      %s60 = ssub.s32 1024, 1024
      %61 = vsyncadd [#allocation8], %s60
      %s62 = sshll.u32 [#allocation7], 4
      %s63 = int_to_ptr.vmem [resolvable:$true] %s62
      %68 = dma.hbm_to_vmem [thread:$0]  %s5, 1024, %s63, [#allocation8], 64, 64, 4
    $region25: #{tpu_custom_call.1} parent=1 // pred_fallthru
      _
    // Predicated region
    $region26: #{tpu_custom_call.1} parent=1 // pred_check
      _
    $region27: #{tpu_custom_call.1} parent=1 // pred_check_branch
      %70 = sbr.rel (0) target = $region29
    $region28: #{tpu_custom_call.1} parent=1 // pred_region
      _
    $region29: #{tpu_custom_call.1} parent=1 // pred_fallthru
      _
    // Predicated region
    $region30: #{tpu_custom_call.1} parent=1 // pred_check
      _
    $region31: #{tpu_custom_call.1} parent=1 // pred_check_branch
      %72 = sbr.rel (0) target = $region33
    $region32: #{tpu_custom_call.1} parent=1 // pred_region
      _
    $region33: #{tpu_custom_call.1} parent=1 // pred_fallthru
      _
    // Predicated region
    $region34: #{tpu_custom_call.1} parent=1 // pred_check
      _
    $region35: #{tpu_custom_call.1} parent=1 // pred_check_branch
      %74 = sbr.rel (0) target = $region37
    $region36: #{tpu_custom_call.1} parent=1 // pred_region
      _
    $region37: #{tpu_custom_call.1} parent=1 // pred_fallthru
      _
    // Predicated region
    $region38: #{tpu_custom_call.1} parent=1 // pred_check
      _
    $region39: #{tpu_custom_call.1} parent=1 // pred_check_branch
      %76 = sbr.rel (0) target = $region41
    $region40: #{tpu_custom_call.1} parent=1 // pred_region
      %77 = dma.done [#allocation3], 128
    $region41: #{tpu_custom_call.1} parent=1 // pred_fallthru
      _
    // Predicated region
    $region42: #{tpu_custom_call.1} parent=1 // pred_check
      _
    $region43: #{tpu_custom_call.1} parent=1 // pred_check_branch
      %79 = sbr.rel (0) target = $region45
    $region44: #{tpu_custom_call.1} parent=1 // pred_region
      %80 = dma.done [#allocation5], 256
    $region45: #{tpu_custom_call.1} parent=1 // pred_fallthru
      _
    // Predicated region
    $region46: #{tpu_custom_call.1} parent=1 // pred_check
      _
    $region47: #{tpu_custom_call.1} parent=1 // pred_check_branch
      %82 = sbr.rel (0) target = $region49
    $region48: #{tpu_custom_call.1} parent=1 // pred_region
      %83 = dma.done [#allocation5], 2048
    $region49: #{tpu_custom_call.1} parent=1 // pred_fallthru
      _
    // Predicated region
    $region50: #{tpu_custom_call.1} parent=1 // pred_check
      _
    $region51: #{tpu_custom_call.1} parent=1 // pred_check_branch
      %85 = sbr.rel (0) target = $region53
    $region52: #{tpu_custom_call.1} parent=1 // pred_region
      %86 = dma.done [#allocation8], 1024
    $region53: #{tpu_custom_call.1} parent=1 // pred_fallthru
      _
    %v88 = vld [vmem:[#allocation2] sm:$0xf]
    %v89 = vld [vmem:[#allocation2 + $0x4] sm:$0xf]
    %v90 = vld [vmem:[#allocation4] sm:$0xff]
    %v91 = vld [vmem:[#allocation4 + $0x8] sm:$0xff]
    %v92 = vld [vmem:[%s2] sm:$0x3]
    %v94 = vlaneseq
    %v95 = vshrl.u32 %v94, 7
    %v96 = vsub.s32 0, %v95
    %v97 = vrot.slane %v92, %v96
    %v98 = vlaneseq
    %v99 = vshrl.u32 %v98, 7
    %v100 = vsub.s32 1, %v99
    %v101 = vrot.slane %v92, %v100
    %v106 = vunpack.c.l.b16 %v88
    %v107 = vunpack.c.l.b16 %v89
    %v108 = vpack.c.b16 %v107, %v106
    %v111 = vunpack.c.l.b16 %v90
    %v112 = vunpack.c.h.b16 %v90
    %v113 = vunpack.c.l.b16 %v91
    %v114 = vunpack.c.h.b16 %v91
    %v115 = vpack.c.b16 %v113, %v111
    %v116 = vpack.c.b16 %v114, %v112
    %vm119 = vcmask 130048
    %v121 = vsel %vm119, %v108, 0
    %123 = vmatprep.subr.bf16.mxu0 %v116
    %124 = vmatpush1.bf16.msra.mxu0 %v115
    %125 = vmatprep.subr.bf16.mxu0 0
    %126 = vmatpush1.bf16.msra.mxu0 0
    %127 = vmatprep.subr.bf16.mxu0 0
    %128 = vmatpush1.bf16.msra.mxu0 0
    %129 = vmatprep.subr.bf16.mxu0 0
    %130 = vmatpush1.bf16.msra.mxu0 0
    %131 = vmatprep.subr.bf16.mxu0 0
    %132 = vmatpush1.bf16.msra.mxu0 0
    %133 = vmatprep.subr.bf16.mxu0 0
    %134 = vmatpush1.bf16.msra.mxu0 0
    %135 = vmatprep.subr.bf16.mxu0 0
    %136 = vmatpush1.bf16.msra.mxu0 0
    %137 = vmatprep.subr.bf16.mxu0 0
    %138 = vmatpush1.bf16.msra.mxu0 0
    %139 = vmatprep.subr.bf16.mxu0 0
    %140 = vmatpush1.bf16.msra.mxu0 0
    %141 = vmatprep.subr.bf16.mxu0 0
    %142 = vmatpush1.bf16.msra.mxu0 0
    %143 = vmatprep.subr.bf16.mxu0 0
    %144 = vmatpush1.bf16.msra.mxu0 0
    %145 = vmatprep.subr.bf16.mxu0 0
    %146 = vmatpush1.bf16.msra.mxu0 0
    %147 = vmatprep.subr.bf16.mxu0 0
    %148 = vmatpush1.bf16.msra.mxu0 0
    %149 = vmatprep.subr.bf16.mxu0 0
    %150 = vmatpush1.bf16.msra.mxu0 0
    %151 = vmatprep.subr.bf16.mxu0 0
    %152 = vmatpush1.bf16.msra.mxu0 0
    %153 = vmatprep.subr.bf16.mxu0 0
    %154 = vmatpush1.bf16.msra.mxu0 0
    %155 = vmatprep.mubr.bf16.mxu0 0
    %156 = vmatmul.mubr.bf16.gmra.mrb[0].mxu0 %v121
    %v157 = vpop.f32.mrb[0].mxu0
    %v158 = vadd.f32 %v97, %v157
    %v159 = vpop.f32.mrb[0].mxu0
    %v160 = vadd.f32 %v101, %v159
    %v161 = vpop.f32.mrb[0].mxu0
    %v162 = vadd.f32 %v97, %v161
    %v163 = vpop.f32.mrb[0].mxu0
    %v164 = vadd.f32 %v101, %v163
    %165 = vdwg.mxu0
    %v166 = vmax.f32 %v158, 0.0
    %v167 = vmax.f32 %v160, 0.0
    %v168 = vmax.f32 %v162, 0.0
    %v169 = vmax.f32 %v164, 0.0
    %v170 = vpack.c.bf16 %v168, %v166
    %v171 = vpack.c.bf16 %v169, %v167
    %v172 = vld [vmem:[#allocation6] sm:$0xf]
    %v173 = vld [vmem:[#allocation6 + $0x4] sm:$0xf]
    %v174 = vld [vmem:[#allocation6 + $0x8] sm:$0xf]
    %v175 = vld [vmem:[#allocation6 + $0xc] sm:$0xf]
    %v176 = vld [vmem:[#allocation6 + $0x10] sm:$0xf]
    %v177 = vld [vmem:[#allocation6 + $0x14] sm:$0xf]
    %v178 = vld [vmem:[#allocation6 + $0x18] sm:$0xf]
    %v179 = vld [vmem:[#allocation6 + $0x1c] sm:$0xf]
    %v180 = vld [vmem:[#allocation6 + $0x20] sm:$0xf]
    %v181 = vld [vmem:[#allocation6 + $0x24] sm:$0xf]
    %v182 = vld [vmem:[#allocation6 + $0x28] sm:$0xf]
    %v183 = vld [vmem:[#allocation6 + $0x2c] sm:$0xf]
    %v184 = vld [vmem:[#allocation6 + $0x30] sm:$0xf]
    %v185 = vld [vmem:[#allocation6 + $0x34] sm:$0xf]
    %v186 = vld [vmem:[#allocation6 + $0x38] sm:$0xf]
    %v187 = vld [vmem:[#allocation6 + $0x3c] sm:$0xf]
    %v188 = vld [vmem:[#allocation6 + $0x40] sm:$0xf]
    %v189 = vld [vmem:[#allocation6 + $0x44] sm:$0xf]
    %v190 = vld [vmem:[#allocation6 + $0x48] sm:$0xf]
    %v191 = vld [vmem:[#allocation6 + $0x4c] sm:$0xf]
    %v192 = vld [vmem:[#allocation6 + $0x50] sm:$0xf]
    %v193 = vld [vmem:[#allocation6 + $0x54] sm:$0xf]
    %v194 = vld [vmem:[#allocation6 + $0x58] sm:$0xf]
    %v195 = vld [vmem:[#allocation6 + $0x5c] sm:$0xf]
    %v196 = vld [vmem:[#allocation6 + $0x60] sm:$0xf]
    %v197 = vld [vmem:[#allocation6 + $0x64] sm:$0xf]
    %v198 = vld [vmem:[#allocation6 + $0x68] sm:$0xf]
    %v199 = vld [vmem:[#allocation6 + $0x6c] sm:$0xf]
    %v200 = vld [vmem:[#allocation6 + $0x70] sm:$0xf]
    %v201 = vld [vmem:[#allocation6 + $0x74] sm:$0xf]
    %v202 = vld [vmem:[#allocation6 + $0x78] sm:$0xf]
    %v203 = vld [vmem:[#allocation6 + $0x7c] sm:$0xf]
    %v204 = vld [vmem:[%s4] sm:$0x1]
    %v206 = vlaneseq
    %v207 = vshrl.u32 %v206, 7
    %v208 = vsub.s32 0, %v207
    %v209 = vrot.slane %v204, %v208
    %v243 = vunpack.c.l.b16 %v172
    %v244 = vunpack.c.l.b16 %v173
    %v245 = vunpack.c.l.b16 %v174
    %v246 = vunpack.c.l.b16 %v175
    %v247 = vunpack.c.l.b16 %v176
    %v248 = vunpack.c.l.b16 %v177
    %v249 = vunpack.c.l.b16 %v178
    %v250 = vunpack.c.l.b16 %v179
    %v251 = vunpack.c.l.b16 %v180
    %v252 = vunpack.c.l.b16 %v181
    %v253 = vunpack.c.l.b16 %v182
    %v254 = vunpack.c.l.b16 %v183
    %v255 = vunpack.c.l.b16 %v184
    %v256 = vunpack.c.l.b16 %v185
    %v257 = vunpack.c.l.b16 %v186
    %v258 = vunpack.c.l.b16 %v187
    %v259 = vunpack.c.l.b16 %v188
    %v260 = vunpack.c.l.b16 %v189
    %v261 = vunpack.c.l.b16 %v190
    %v262 = vunpack.c.l.b16 %v191
    %v263 = vunpack.c.l.b16 %v192
    %v264 = vunpack.c.l.b16 %v193
    %v265 = vunpack.c.l.b16 %v194
    %v266 = vunpack.c.l.b16 %v195
    %v267 = vunpack.c.l.b16 %v196
    %v268 = vunpack.c.l.b16 %v197
    %v269 = vunpack.c.l.b16 %v198
    %v270 = vunpack.c.l.b16 %v199
    %v271 = vunpack.c.l.b16 %v200
    %v272 = vunpack.c.l.b16 %v201
    %v273 = vunpack.c.l.b16 %v202
    %v274 = vunpack.c.l.b16 %v203
    %v275 = vpack.c.b16 %v244, %v243
    %v276 = vpack.c.b16 %v246, %v245
    %v277 = vpack.c.b16 %v248, %v247
    %v278 = vpack.c.b16 %v250, %v249
    %v279 = vpack.c.b16 %v252, %v251
    %v280 = vpack.c.b16 %v254, %v253
    %v281 = vpack.c.b16 %v256, %v255
    %v282 = vpack.c.b16 %v258, %v257
    %v283 = vpack.c.b16 %v260, %v259
    %v284 = vpack.c.b16 %v262, %v261
    %v285 = vpack.c.b16 %v264, %v263
    %v286 = vpack.c.b16 %v266, %v265
    %v287 = vpack.c.b16 %v268, %v267
    %v288 = vpack.c.b16 %v270, %v269
    %v289 = vpack.c.b16 %v272, %v271
    %v290 = vpack.c.b16 %v274, %v273
    %307 = vmatprep.subr.bf16.mxu0 0
    %308 = vmatpush1.bf16.msra.mxu0 %v275
    %309 = vmatprep.subr.bf16.mxu0 0
    %310 = vmatpush1.bf16.msra.mxu0 %v276
    %311 = vmatprep.subr.bf16.mxu0 0
    %312 = vmatpush1.bf16.msra.mxu0 %v277
    %313 = vmatprep.subr.bf16.mxu0 0
    %314 = vmatpush1.bf16.msra.mxu0 %v278
    %315 = vmatprep.subr.bf16.mxu0 0
    %316 = vmatpush1.bf16.msra.mxu0 %v279
    %317 = vmatprep.subr.bf16.mxu0 0
    %318 = vmatpush1.bf16.msra.mxu0 %v280
    %319 = vmatprep.subr.bf16.mxu0 0
    %320 = vmatpush1.bf16.msra.mxu0 %v281
    %321 = vmatprep.subr.bf16.mxu0 0
    %322 = vmatpush1.bf16.msra.mxu0 %v282
    %323 = vmatprep.subr.bf16.mxu0 0
    %324 = vmatpush1.bf16.msra.mxu0 %v283
    %325 = vmatprep.subr.bf16.mxu0 0
    %326 = vmatpush1.bf16.msra.mxu0 %v284
    %327 = vmatprep.subr.bf16.mxu0 0
    %328 = vmatpush1.bf16.msra.mxu0 %v285
    %329 = vmatprep.subr.bf16.mxu0 0
    %330 = vmatpush1.bf16.msra.mxu0 %v286
    %331 = vmatprep.subr.bf16.mxu0 0
    %332 = vmatpush1.bf16.msra.mxu0 %v287
    %333 = vmatprep.subr.bf16.mxu0 0
    %334 = vmatpush1.bf16.msra.mxu0 %v288
    %335 = vmatprep.subr.bf16.mxu0 0
    %336 = vmatpush1.bf16.msra.mxu0 %v289
    %337 = vmatprep.subr.bf16.mxu0 0
    %338 = vmatpush1.bf16.msra.mxu0 %v290
    %339 = vmatprep.mubr.bf16.mxu0 %v171
    %340 = vmatmul.mubr.bf16.gmra.mrb[0].mxu0 %v170
    %v341 = vpop.f32.mrb[0].mxu0
    %v342 = vadd.f32 %v209, %v341
    %v343 = vpop.f32.mrb[0].mxu0
    %v344 = vpop.f32.mrb[0].mxu0
    %v345 = vadd.f32 %v209, %v344
    %v346 = vpop.f32.mrb[0].mxu0
    %347 = vdwg.mxu0
    %v348 = vmax.f32 %v342, 0.0
    %v349 = vmax.f32 %v345, 0.0
    %v350 = vpack.c.bf16 %v349, %v348
    %v351 = vld [vmem:[#allocation7] sm:$0xf]
    %v352 = vld [vmem:[#allocation7 + $0x4] sm:$0xf]
    %v353 = vld [vmem:[#allocation7 + $0x8] sm:$0xf]
    %v354 = vld [vmem:[#allocation7 + $0xc] sm:$0xf]
    %v355 = vld [vmem:[#allocation7 + $0x10] sm:$0xf]
    %v356 = vld [vmem:[#allocation7 + $0x14] sm:$0xf]
    %v357 = vld [vmem:[#allocation7 + $0x18] sm:$0xf]
    %v358 = vld [vmem:[#allocation7 + $0x1c] sm:$0xf]
    %v359 = vld [vmem:[#allocation7 + $0x20] sm:$0xf]
    %v360 = vld [vmem:[#allocation7 + $0x24] sm:$0xf]
    %v361 = vld [vmem:[#allocation7 + $0x28] sm:$0xf]
    %v362 = vld [vmem:[#allocation7 + $0x2c] sm:$0xf]
    %v363 = vld [vmem:[#allocation7 + $0x30] sm:$0xf]
    %v364 = vld [vmem:[#allocation7 + $0x34] sm:$0xf]
    %v365 = vld [vmem:[#allocation7 + $0x38] sm:$0xf]
    %v366 = vld [vmem:[#allocation7 + $0x3c] sm:$0xf]
    %v367 = vld [vmem:[%s6] sm:$0x1]
    %v369 = vlaneseq
    %v370 = vshrl.u32 %v369, 7
    %v371 = vsub.s32 0, %v370
    %v372 = vrot.slane %v367, %v371
    %v390 = vunpack.c.l.b16 %v351
    %v391 = vunpack.c.l.b16 %v352
    %v392 = vunpack.c.l.b16 %v353
    %v393 = vunpack.c.l.b16 %v354
    %v394 = vunpack.c.l.b16 %v355
    %v395 = vunpack.c.l.b16 %v356
    %v396 = vunpack.c.l.b16 %v357
    %v397 = vunpack.c.l.b16 %v358
    %v398 = vunpack.c.l.b16 %v359
    %v399 = vunpack.c.l.b16 %v360
    %v400 = vunpack.c.l.b16 %v361
    %v401 = vunpack.c.l.b16 %v362
    %v402 = vunpack.c.l.b16 %v363
    %v403 = vunpack.c.l.b16 %v364
    %v404 = vunpack.c.l.b16 %v365
    %v405 = vunpack.c.l.b16 %v366
    %v406 = vpack.c.b16 %v391, %v390
    %v407 = vpack.c.b16 %v393, %v392
    %v408 = vpack.c.b16 %v395, %v394
    %v409 = vpack.c.b16 %v397, %v396
    %v410 = vpack.c.b16 %v399, %v398
    %v411 = vpack.c.b16 %v401, %v400
    %v412 = vpack.c.b16 %v403, %v402
    %v413 = vpack.c.b16 %v405, %v404
    %422 = vmatprep.subr.bf16.mxu0 0
    %423 = vmatpush1.bf16.msra.mxu0 %v406
    %424 = vmatprep.subr.bf16.mxu0 0
    %425 = vmatpush1.bf16.msra.mxu0 %v407
    %426 = vmatprep.subr.bf16.mxu0 0
    %427 = vmatpush1.bf16.msra.mxu0 %v408
    %428 = vmatprep.subr.bf16.mxu0 0
    %429 = vmatpush1.bf16.msra.mxu0 %v409
    %430 = vmatprep.subr.bf16.mxu0 0
    %431 = vmatpush1.bf16.msra.mxu0 %v410
    %432 = vmatprep.subr.bf16.mxu0 0
    %433 = vmatpush1.bf16.msra.mxu0 %v411
    %434 = vmatprep.subr.bf16.mxu0 0
    %435 = vmatpush1.bf16.msra.mxu0 %v412
    %436 = vmatprep.subr.bf16.mxu0 0
    %437 = vmatpush1.bf16.msra.mxu0 %v413
    %438 = vmatprep.subr.bf16.mxu0 0
    %439 = vmatpush1.bf16.msra.mxu0 0
    %440 = vmatprep.subr.bf16.mxu0 0
    %441 = vmatpush1.bf16.msra.mxu0 0
    %442 = vmatprep.subr.bf16.mxu0 0
    %443 = vmatpush1.bf16.msra.mxu0 0
    %444 = vmatprep.subr.bf16.mxu0 0
    %445 = vmatpush1.bf16.msra.mxu0 0
    %446 = vmatprep.subr.bf16.mxu0 0
    %447 = vmatpush1.bf16.msra.mxu0 0
    %448 = vmatprep.subr.bf16.mxu0 0
    %449 = vmatpush1.bf16.msra.mxu0 0
    %450 = vmatprep.subr.bf16.mxu0 0
    %451 = vmatpush1.bf16.msra.mxu0 0
    %452 = vmatprep.subr.bf16.mxu0 0
    %453 = vmatpush1.bf16.msra.mxu0 0
    %454 = vmatprep.mubr.bf16.mxu0 0
    %455 = vmatmul.mubr.bf16.gmra.mrb[0].mxu0 %v350
    %v456 = vpop.f32.mrb[0].mxu0
    %v457 = vadd.f32 %v372, %v456
    %v458 = vpop.f32.mrb[0].mxu0
    %v459 = vpop.f32.mrb[0].mxu0
    %v460 = vadd.f32 %v372, %v459
    %v461 = vpop.f32.mrb[0].mxu0
    %462 = vdwg.mxu0
    %v463 = vmax.f32 %v457, 0.0
    %v464 = vmax.f32 %v460, 0.0
    %v465 = vld [vmem:[%s7] sm:$0x1]
    %v466 = vlaneseq
    %v467 = vshrl.u32 %v466, 7
    %v468 = vsub.s32 0, %v467
    %v469 = vrot.slane %v465, %v468
    %v470 = vmul.f32 %v463, %v469
    %v471 = vmul.f32 %v464, %v469
    %472 = vadd.xlane.f32.xlu0 %v470
    %v473 = vpop.xlane.xlu0 %472
    %474 = vadd.xlane.f32.xlu0 %v471
    %v475 = vpop.xlane.xlu0 %474
    %v476 = vld [vmem:[%s8] sm:$0x1]
    %v478 = vlaneseq
    %v479 = vshrl.u32 %v478, 7
    %v480 = vsub.s32 0, %v479
    %v481 = vrot.slane %v476, %v480
    %v483 = vadd.f32 %v473, %v481
    %v484 = vadd.f32 %v475, %v481
    %vm485 = vcmask 7168
    %486 = vst.msk [vmem:[%s9] sm:$0xff] %vm485, %v483
    %487 = vst.msk [vmem:[%s9 + $0x8] sm:$0xff] %vm485, %v484
    %v488 = vld [vmem:[%s7 + $0x1] sm:$0x1]
    %v489 = vlaneseq
    %v490 = vshrl.u32 %v489, 7
    %v491 = vsub.s32 0, %v490
    %v492 = vrot.slane %v488, %v491
    %v493 = vmul.f32 %v463, %v492
    %v494 = vmul.f32 %v464, %v492
    %495 = vadd.xlane.f32.xlu0 %v493
    %v496 = vpop.xlane.xlu0 %495
    %497 = vadd.xlane.f32.xlu0 %v494
    %v498 = vpop.xlane.xlu0 %497
    %v499 = vld [vmem:[%s8] sm:$0x1]
    %v501 = vlaneseq
    %v502 = vshrl.u32 %v501, 7
    %v503 = vsub.s32 0, %v502
    %v504 = vrot.slane %v499, %v503
    %v506 = vadd.f32 %v496, %v504
    %v507 = vadd.f32 %v498, %v504
    %vm508 = vcmask 15368
    %509 = vst.msk [vmem:[%s9] sm:$0xff] %vm508, %v506
    %510 = vst.msk [vmem:[%s9 + $0x8] sm:$0xff] %vm508, %v507
    // Predicated region
    $region54: #{tpu_custom_call.1} parent=1 // pred_check
      _
    $region55: #{tpu_custom_call.1} parent=1 // pred_check_branch
      %512 = sbr.rel (0) target = $region57
    $region56: #{tpu_custom_call.1} parent=1 // pred_region
      _
    $region57: #{tpu_custom_call.1} parent=1 // pred_fallthru
      _
    // Predicated region
    $region58: #{tpu_custom_call.1} parent=1 // pred_check
      _
    $region59: #{tpu_custom_call.1} parent=1 // pred_check_branch
      %514 = sbr.rel (0) target = $region61
    $region60: #{tpu_custom_call.1} parent=1 // pred_region
      _
    $region61: #{tpu_custom_call.1} parent=1 // pred_fallthru
      _
    %515 = vsyncpa [#allocation3], 1
    %516 = vsyncpa [#allocation5], 1
    %517 = vsyncpa [#allocation8], 1

</llo_original>
